<compile_context>
chip_gen: v7x
topology: tpu7x:2x2x1
jax: 0.10.0
libtpu: 0.0.40
codegen_flags: <defaults>
</compile_context>

<pallas_src>
import functools
import math

import jax
import jax.numpy as jnp
import numpy as np
from jax.experimental import pallas as pl
from jax.experimental.pallas import tpu as pltpu

# TODO(synk): EPS is an undefined module-level constant in the reference source; using 1e-7.
EPS = 1e-7

_LANE = 128
_TARGET_LOGITS_BLOCK_BYTES = 2 * 1024 * 1024   # ~2 MiB logits payload per grid step


def _penalty_entropy_kernel(x_ref, t_ref, out_ref, *, hw, num_classes, thw, eps):
    j = pl.program_id(1)

    x = x_ref[...].astype(jnp.float32)          # (1, C, thw) -- classes on sublanes
    t = t_ref[...]                              # (1, 1, thw) int32 targets

    # Lane validity: the last block along HW may extend past the array end.
    lane = jax.lax.broadcasted_iota(jnp.int32, (1, 1, thw), 2)
    valid = (j * thw + lane) < hw               # (1, 1, thw) bool
    validf = valid.astype(jnp.float32)
    # Mask garbage logits BEFORE max/exp so NaN/Inf padding cannot propagate.
    x = jnp.where(valid, x, 0.0)

    # Numerically-stable softmax over the class (sublane) axis -- one exp pass only.
    m = jnp.max(x, axis=1, keepdims=True)       # (1, 1, thw)
    xs = x - m
    e = jnp.exp(xs)                             # (1, C, thw)  (only full-tile EUP op)
    s = jnp.sum(e, axis=1, keepdims=True)       # (1, 1, thw)
    logp = xs - jnp.log(s)                      # (1, C, thw)
    p = e * pl.reciprocal(s)                    # exact reciprocal over thw elems only

    # Cross-entropy at the target class via a one-hot select (no dynamic gather).
    cls = jax.lax.broadcasted_iota(jnp.int32, (1, num_classes, thw), 1)
    onehot = (cls == t).astype(jnp.float32)     # (1, C, thw)
    ce_sum = -jnp.sum(onehot * logp * validf)

    # Entropy: -clip(p) * log(clip(p)); log is monotone, so clip logp directly
    # instead of re-exponentiating / re-logging (saves two full-tile EUP passes).
    pc = jnp.clip(p, eps, 1.0 - eps)
    lpc = jnp.clip(logp, math.log(eps), math.log1p(-eps))
    ent_sum = -jnp.sum(pc * lpc * validf)

    # Per-block partials in a lane-dense (1,128) tile: lane 0 = CE, lane 1 = entropy.
    out_lane = jax.lax.broadcasted_iota(jnp.int32, (1, _LANE), 1)
    tile = jnp.where(out_lane == 0, ce_sum,
                     jnp.where(out_lane == 1, ent_sum, 0.0))
    out_ref[...] = tile.reshape(1, 1, 1, _LANE)


def _choose_thw(hw, num_classes, itemsize):
    """Pick the HW tile width: ~2 MiB of logits per block, multiple of 128 lanes."""
    if hw % _LANE != 0:
        # Equal-to-full-dim block is always legal.
        # TODO(synk): a very large H*W that is not a multiple of 128 would make this
        # single block exceed VMEM; not a case this segmentation-style loss hits.
        return hw
    target = _TARGET_LOGITS_BLOCK_BYTES // max(1, num_classes * itemsize)
    target = max(_LANE, (target // _LANE) * _LANE)
    return int(min(target, hw))


def penalty_entropy(inputs, targets, *, alpha=1.0, eps=EPS):
    """Returns (loss, loss_ce, loss_ent).

    ignore_index defaults to -100 (< 0) in the reference module, so -- exactly as in
    the PyTorch forward -- no target filtering is performed.
    """
    if inputs.ndim > 2:
        n, c = inputs.shape[0], inputs.shape[1]
        hw = int(np.prod(inputs.shape[2:]))
        x = inputs.reshape(n, c, hw)                       # free view: class on sublanes
        t = targets.reshape(n, 1, hw).astype(jnp.int32)
    else:
        # (M, C) row-matrix case: relayout once so the large M axis lands on lanes.
        m_rows, c = inputs.shape
        n, hw = 1, m_rows
        x = jnp.transpose(inputs, (1, 0)).reshape(1, c, hw)
        t = targets.reshape(1, 1, hw).astype(jnp.int32)

    thw = _choose_thw(hw, c, x.dtype.itemsize)
    nb = int(pl.cdiv(hw, thw))

    kernel = functools.partial(
        _penalty_entropy_kernel,
        hw=hw, num_classes=c, thw=thw, eps=eps)

    # Default double-buffering is sufficient (one heavy input stream); deeper
    # pipeline_mode=pl.Buffered(3) could be added if the DMA were still exposed.
    partials = pl.pallas_call(
        kernel,
        out_shape=jax.ShapeDtypeStruct((n, nb, 1, _LANE), jnp.float32),
        grid_spec=pltpu.PrefetchScalarGridSpec(
            num_scalar_prefetch=0,
            grid=(n, nb),
            in_specs=[
                pl.BlockSpec((1, c, thw), lambda b, j: (b, 0, j)),
                pl.BlockSpec((1, 1, thw), lambda b, j: (b, 0, j)),
            ],
            out_specs=pl.BlockSpec((1, 1, 1, _LANE), lambda b, j: (b, j, 0, 0)),
        ),
        compiler_params=pltpu.CompilerParams(
            dimension_semantics=("parallel", "parallel"),
            vmem_limit_bytes=48 * 1024 * 1024),
    )(x, t)

    # Tiny final reduction / means in plain JAX (keeps the grid fully parallel).
    ce_total = jnp.sum(partials[..., 0, 0])
    ent_total = jnp.sum(partials[..., 0, 1])
    denom = jnp.float32(n * hw)
    loss_ce = ce_total / denom
    loss_ent = ent_total / (denom * jnp.float32(c))
    loss = loss_ce - jnp.float32(alpha) * loss_ent
    return loss, loss_ce, loss_ent


def penalty_entropy_ref(inputs, targets, alpha=1.0, eps=EPS):
    """Pure-JAX reference mirroring the PyTorch forward."""
    n, c = inputs.shape[0], inputs.shape[1]
    x = inputs.reshape(n, c, -1)
    x = jnp.transpose(x, (0, 2, 1)).reshape(-1, c)
    t = targets.reshape(-1)
    logp = jax.nn.log_softmax(x, axis=1)
    loss_ce = -jnp.mean(jnp.take_along_axis(logp, t[:, None], axis=1))
    p = jnp.clip(jnp.exp(logp), eps, 1.0 - eps)
    ent = -p * jnp.log(p)
    loss_ent = jnp.mean(ent)
    return loss_ce - alpha * loss_ent, loss_ce, loss_ent


if __name__ == "__main__":
    key = jax.random.PRNGKey(0)
    kx, kt = jax.random.split(key)
    N, C, H, W = 2, 4, 16, 16
    x = jax.random.normal(kx, (N, C, H, W), dtype=jnp.float32)
    targets = jax.random.randint(kt, (N, H, W), 0, C, dtype=jnp.int32)

    loss, loss_ce, loss_ent = penalty_entropy(x, targets, alpha=1.0)
    jax.block_until_ready((loss, loss_ce, loss_ent))

    ref = penalty_entropy_ref(x, targets, alpha=1.0)
    np.testing.assert_allclose(
        np.array([loss, loss_ce, loss_ent], dtype=np.float32),
        np.array([ref[0], ref[1], ref[2]], dtype=np.float32),
        rtol=1e-5, atol=1e-5)

    print("KERNEL_OK")
</pallas_src>

<mosaic_0001>
module attributes {stable_mosaic.version = 11 : i64} {
  func.func @_penalty_entropy_kernel(%arg0: i32, %arg1: i32, %arg2: memref<1x4x256xf32, #tpu.memory_space<vmem>>, %arg3: memref<1x1x256xi32, #tpu.memory_space<vmem>>, %arg4: memref<1x1x1x128xf32, #tpu.memory_space<vmem>>) attributes {dimension_semantics = [#tpu.dimension_semantics<parallel>, #tpu.dimension_semantics<parallel>], iteration_bounds = array<i64: 2, 1>, scalar_prefetch = 0 : i64, scratch_operands = 0 : i64, tpu.core_type = #tpu.core_type<tc>, window_params = [{transform_indices = @transform_0, window_bounds = array<i64: 1, 4, 256>}, {transform_indices = @transform_1, window_bounds = array<i64: 1, 1, 256>}, {transform_indices = @transform_2, window_bounds = array<i64: 1, 1, 1, 128>}]} {
    %c0 = arith.constant 0 : index
    %c0_0 = arith.constant 0 : index
    %c0_1 = arith.constant 0 : index
    %0 = vector.load %arg2[%c0, %c0_0, %c0_1] : memref<1x4x256xf32, #tpu.memory_space<vmem>>, vector<1x4x256xf32>
    %c0_2 = arith.constant 0 : index
    %c0_3 = arith.constant 0 : index
    %c0_4 = arith.constant 0 : index
    %1 = vector.load %arg3[%c0_2, %c0_3, %c0_4] : memref<1x1x256xi32, #tpu.memory_space<vmem>>, vector<1x1x256xi32>
    %2 = tpu.iota {dimensions = array<i32: 2>} : vector<1x1x256xi32>
    %c256_i32 = arith.constant 256 : i32
    %3 = arith.muli %arg1, %c256_i32 : i32
    %4 = vector.broadcast %3 : i32 to vector<1x1x256xi32>
    %5 = arith.addi %4, %2 : vector<1x1x256xi32>
    %c256_i32_5 = arith.constant 256 : i32
    %6 = vector.broadcast %c256_i32_5 : i32 to vector<1x1x256xi32>
    %7 = arith.cmpi slt, %5, %6 : vector<1x1x256xi32>
    %8 = arith.extui %7 : vector<1x1x256xi1> to vector<1x1x256xi32>
    %9 = arith.sitofp %8 : vector<1x1x256xi32> to vector<1x1x256xf32>
    %cst = arith.constant 0.000000e+00 : f32
    %10 = vector.shape_cast %7 : vector<1x1x256xi1> to vector<1x1x256xi1>
    %11 = vector.broadcast %10 : vector<1x1x256xi1> to vector<1x4x256xi1>
    %12 = vector.broadcast %cst : f32 to vector<1x4x256xf32>
    %13 = arith.select %11, %0, %12 : vector<1x4x256xi1>, vector<1x4x256xf32>
    %cst_6 = arith.constant dense<0xFF800000> : vector<1x256xf32>
    %14 = vector.multi_reduction <maximumf>, %13, %cst_6 [1] : vector<1x4x256xf32> to vector<1x256xf32>
    %15 = vector.shape_cast %14 : vector<1x256xf32> to vector<1x1x256xf32>
    %16 = vector.broadcast %15 : vector<1x1x256xf32> to vector<1x4x256xf32>
    %17 = arith.subf %13, %16 : vector<1x4x256xf32>
    %18 = math.exp %17 : vector<1x4x256xf32>
    %cst_7 = arith.constant dense<0.000000e+00> : vector<1x256xf32>
    %19 = vector.multi_reduction <add>, %18, %cst_7 [1] : vector<1x4x256xf32> to vector<1x256xf32>
    %20 = vector.shape_cast %19 : vector<1x256xf32> to vector<1x1x256xf32>
    %21 = math.log %20 : vector<1x1x256xf32>
    %22 = vector.broadcast %21 : vector<1x1x256xf32> to vector<1x4x256xf32>
    %23 = arith.subf %17, %22 : vector<1x4x256xf32>
    %24 = tpu.reciprocal %20 : vector<1x1x256xf32> -> vector<1x1x256xf32>
    %25 = vector.broadcast %24 : vector<1x1x256xf32> to vector<1x4x256xf32>
    %26 = arith.mulf %18, %25 : vector<1x4x256xf32>
    %27 = tpu.iota {dimensions = array<i32: 1>} : vector<1x4x256xi32>
    %28 = vector.broadcast %1 : vector<1x1x256xi32> to vector<1x4x256xi32>
    %29 = arith.cmpi eq, %27, %28 : vector<1x4x256xi32>
    %30 = arith.extui %29 : vector<1x4x256xi1> to vector<1x4x256xi32>
    %31 = arith.sitofp %30 : vector<1x4x256xi32> to vector<1x4x256xf32>
    %32 = arith.mulf %31, %23 : vector<1x4x256xf32>
    %33 = vector.broadcast %9 : vector<1x1x256xf32> to vector<1x4x256xf32>
    %34 = arith.mulf %32, %33 : vector<1x4x256xf32>
    %35 = vector.shape_cast %34 : vector<1x4x256xf32> to vector<1x1x4x256xf32>
    %cst_8 = arith.constant dense<0.000000e+00> : vector<1xf32>
    %36 = vector.multi_reduction <add>, %35, %cst_8 [1, 2, 3] : vector<1x1x4x256xf32> to vector<1xf32>
    %37 = vector.shape_cast %36 : vector<1xf32> to vector<1x1x1x1xf32>
    %38 = vector.extract %37[0, 0, 0, 0] : f32 from vector<1x1x1x1xf32>
    %cst_9 = arith.constant 0.000000e+00 : f32
    %39 = arith.subf %cst_9, %38 : f32
    %cst_10 = arith.constant 1.000000e-07 : f32
    %cst_11 = arith.constant 0.99999988 : f32
    %40 = vector.broadcast %cst_10 : f32 to vector<1x4x256xf32>
    %41 = arith.maximumf %40, %26 : vector<1x4x256xf32>
    %42 = vector.broadcast %cst_11 : f32 to vector<1x4x256xf32>
    %43 = arith.minimumf %42, %41 : vector<1x4x256xf32>
    %cst_12 = arith.constant -16.1180954 : f32
    %cst_13 = arith.constant -1.00000008E-7 : f32
    %44 = vector.broadcast %cst_12 : f32 to vector<1x4x256xf32>
    %45 = arith.maximumf %44, %23 : vector<1x4x256xf32>
    %46 = vector.broadcast %cst_13 : f32 to vector<1x4x256xf32>
    %47 = arith.minimumf %46, %45 : vector<1x4x256xf32>
    %48 = arith.mulf %43, %47 : vector<1x4x256xf32>
    %49 = vector.broadcast %9 : vector<1x1x256xf32> to vector<1x4x256xf32>
    %50 = arith.mulf %48, %49 : vector<1x4x256xf32>
    %51 = vector.shape_cast %50 : vector<1x4x256xf32> to vector<1x1x4x256xf32>
    %cst_14 = arith.constant dense<0.000000e+00> : vector<1xf32>
    %52 = vector.multi_reduction <add>, %51, %cst_14 [1, 2, 3] : vector<1x1x4x256xf32> to vector<1xf32>
    %53 = vector.shape_cast %52 : vector<1xf32> to vector<1x1x1x1xf32>
    %54 = vector.extract %53[0, 0, 0, 0] : f32 from vector<1x1x1x1xf32>
    %cst_15 = arith.constant 0.000000e+00 : f32
    %55 = arith.subf %cst_15, %54 : f32
    %56 = tpu.iota {dimensions = array<i32: 1>} : vector<1x128xi32>
    %c0_i32 = arith.constant 0 : i32
    %57 = vector.broadcast %c0_i32 : i32 to vector<1x128xi32>
    %58 = arith.cmpi eq, %56, %57 : vector<1x128xi32>
    %c1_i32 = arith.constant 1 : i32
    %59 = vector.broadcast %c1_i32 : i32 to vector<1x128xi32>
    %60 = arith.cmpi eq, %56, %59 : vector<1x128xi32>
    %cst_16 = arith.constant 0.000000e+00 : f32
    %61 = vector.broadcast %55 : f32 to vector<1x128xf32>
    %62 = vector.broadcast %cst_16 : f32 to vector<1x128xf32>
    %63 = arith.select %60, %61, %62 : vector<1x128xi1>, vector<1x128xf32>
    %64 = vector.broadcast %39 : f32 to vector<1x128xf32>
    %65 = arith.select %58, %64, %63 : vector<1x128xi1>, vector<1x128xf32>
    %66 = vector.shape_cast %65 : vector<1x128xf32> to vector<1x1x1x128xf32>
    %c0_17 = arith.constant 0 : index
    %c0_18 = arith.constant 0 : index
    %c0_19 = arith.constant 0 : index
    %c0_20 = arith.constant 0 : index
    %67 = vector.load %arg4[%c0_17, %c0_18, %c0_19, %c0_20] : memref<1x1x1x128xf32, #tpu.memory_space<vmem>>, vector<1x1x1x128xf32>
    tpu.vector_store %arg4[%c0_17, %c0_18, %c0_19, %c0_20], %66 {strides = array<i32>} : memref<1x1x1x128xf32, #tpu.memory_space<vmem>>, vector<1x1x1x128xf32>,
    return
  }
  func.func @transform_0(%arg0: i32, %arg1: i32) -> (i32, i32, i32) {
    %c0_i32 = arith.constant 0 : i32
    %c0_i32_0 = arith.constant 0 : i32
    return %arg0, %c0_i32, %arg1 : i32, i32, i32
  }
  func.func @transform_1(%arg0: i32, %arg1: i32) -> (i32, i32, i32) {
    %c0_i32 = arith.constant 0 : i32
    %c0_i32_0 = arith.constant 0 : i32
    return %arg0, %c0_i32, %arg1 : i32, i32, i32
  }
  func.func @transform_2(%arg0: i32, %arg1: i32) -> (i32, i32, i32, i32) {
    %c0_i32 = arith.constant 0 : i32
    %c0_i32_0 = arith.constant 0 : i32
    %c0_i32_1 = arith.constant 0 : i32
    return %arg0, %arg1, %c0_i32, %c0_i32_0 : i32, i32, i32, i32
  }
}

</mosaic_0001>

<llo_original>
// kernel: tpu_custom_call.1
$region0: #{tpu_custom_call.1}
  #allocation0 [shape = 'u32[]', space=smem, size = 0x4, offset = 0x4, fixed_abs, tag = 'smem constant byte address 0x4 - core index']
  #allocation1 [shape = 'u32[144,128]{1,0:T(1,128)}', space=vmem, size = 0x12000, scoped, tag = 'internal scratch']
  %s0 = inlined_call_operand.hbm [shape: f32[2,4,256], index: 0, kind: input, shape index: {}]
  %s1 = inlined_call_operand.hbm [shape: s32[2,1,256], index: 1, kind: input, shape index: {}]
  %s2 = inlined_call_operand.hbm [shape: f32[2,1,1,128], index: 2, kind: output, shape index: {}]
  %s3 = sld [smem:[#allocation0]]
  $region49: #{tpu_custom_call.1} parent=0
    _
  %s5 = ssub.s32 1, %s3
  %s6 = scalar_select 0, %s5, %s3
  $region1: #{tpu_custom_call.1} parent=0
    #allocation2 [shape = 'u8[8192]{0}', space=vmem, size = 0x2000, scoped, tag = 'input window, operand 0']
    #allocation3 [shape = 's32[2]{0}', space=sflag, size = 0x8, scoped, tag = 'scoped memory for tpu_custom_call.1']
    #allocation4 [shape = 's32[2]{0}', space=sflag, size = 0x8, scoped, tag = 'scoped memory for tpu_custom_call.1']
    #allocation5 [shape = 'u8[2048]{0}', space=vmem, size = 0x800, scoped, tag = 'input window, operand 1']
    #allocation6 [shape = 's32[2]{0}', space=sflag, size = 0x8, scoped, tag = 'scoped memory for tpu_custom_call.1']
    #allocation7 [shape = 'u8[1024]{0}', space=vmem, size = 0x400, scoped, tag = 'output window, operand 0']
    %7 = vsyncpa [#allocation3], 0
    %s8 = scalar_lea.sflag [#allocation3], 1
    %9 = vsyncpa %s8, 0
    %10 = vsyncpa [#allocation6], 0
    %s11 = scalar_lea.sflag [#allocation6], 1
    %12 = vsyncpa %s11, 0
    %13 = vsyncpa [#allocation4], 0
    %s14 = scalar_lea.sflag [#allocation4], 1
    %15 = vsyncpa %s14, 0
    loop: start=0, step=1, limit=4
    $region2: #{tpu_custom_call.1} parent=1 // loop_pre_header
      _
    $region3: #{tpu_custom_call.1} parent=1 // loop_header
      %s17 = sphi 0, %s21
      %p18 = scmp.ge.s32.totalorder %s17, 4
      %s24 = sphi 0, %s36
      %s25 = sphi 0, %s32
      %s26 = sphi 0, %s24
      %s27 = sphi 0, %s25
      %s28 = sphi 0, %s26
      %s29 = sphi 0, %s27
      %s41 = sphi 0, %s43
      %s44 = sphi 0, %s41
      %s45 = sphi 0, %s44
      %s61 = sphi 0, %s45
      %s69 = sphi 0, %s71
      %s72 = sphi 0, %s69
      %s73 = sphi 0, %s72
      %s89 = sphi 0, %s73
      %s97 = sphi 0, %s99
      %s100 = sphi 0, %s97
      %s101 = sphi 0, %s100
      %s117 = sphi 0, %s101
    $region4: #{tpu_custom_call.1} parent=1 // loop_header_branch
      %20 = sbr.rel (%p18) target = $region8
    $region5: #{tpu_custom_call.1} parent=1 // loop_body
      %s22 = ssub.s32 %s17, 1
      %s23 = ssub.s32 %s17, 2
      %s30 = sadd.s32 1, %s25
      %p31 = scmp.ge.s32.totalorder %s30, 1
      %s32 = scalar_select %p31, 0, %s30
      %s33 = sadd.s32 1, %s24
      %s34 = scalar_select %p31, %s33, %s24
      %p35 = scmp.ge.s32.totalorder %s34, 2
      %s36 = scalar_select %p35, 0, %s34
      %s37 = ssub.s32 %s24, %s36
      %s38 = ssub.s32 %s25, %s32
      %s39 = sor.u32 %s37, %s38
      %p40 = scmp.eq.s32.totalorder %s39, 0
      %s42 = sadd.s32 %s41, 1
      %s43 = scalar_select %p40, %s41, %s42
      %p46 = pneg %p40
      %p47 = scmp.eq.s32.totalorder %s17, 1
      %p48 = por %p46, %p47
      %p49 = scmp.ne.s32.totalorder %s41, %s44
      %p50 = scmp.eq.s32.totalorder %s17, 0
      %p51 = por %p49, %p50
      %p52 = scmp.ne.s32.totalorder %s41, %s44
      %p53 = scmp.eq.s32.totalorder %s22, 1
      %p54 = por %p52, %p53
      %p55 = scmp.ne.s32.totalorder %s44, %s45
      %p56 = scmp.eq.s32.totalorder %s22, 0
      %p57 = por %p55, %p56
      %p58 = scmp.ne.s32.totalorder %s44, %s45
      %p59 = scmp.eq.s32.totalorder %s23, 1
      %p60 = por %p58, %p59
      %p62 = scmp.ne.s32.totalorder %s45, %s61
      %p63 = scmp.eq.s32.totalorder %s23, 0
      %p64 = por %p62, %p63
      %s65 = ssub.s32 %s24, %s36
      %s66 = ssub.s32 %s25, %s32
      %s67 = sor.u32 %s65, %s66
      %p68 = scmp.eq.s32.totalorder %s67, 0
      %s70 = sadd.s32 %s69, 1
      %s71 = scalar_select %p68, %s69, %s70
      %p74 = pneg %p68
      %p75 = scmp.eq.s32.totalorder %s17, 1
      %p76 = por %p74, %p75
      %p77 = scmp.ne.s32.totalorder %s69, %s72
      %p78 = scmp.eq.s32.totalorder %s17, 0
      %p79 = por %p77, %p78
      %p80 = scmp.ne.s32.totalorder %s69, %s72
      %p81 = scmp.eq.s32.totalorder %s22, 1
      %p82 = por %p80, %p81
      %p83 = scmp.ne.s32.totalorder %s72, %s73
      %p84 = scmp.eq.s32.totalorder %s22, 0
      %p85 = por %p83, %p84
      %p86 = scmp.ne.s32.totalorder %s72, %s73
      %p87 = scmp.eq.s32.totalorder %s23, 1
      %p88 = por %p86, %p87
      %p90 = scmp.ne.s32.totalorder %s73, %s89
      %p91 = scmp.eq.s32.totalorder %s23, 0
      %p92 = por %p90, %p91
      %s93 = ssub.s32 %s24, %s36
      %s94 = ssub.s32 %s25, %s32
      %s95 = sor.u32 %s93, %s94
      %p96 = scmp.eq.s32.totalorder %s95, 0
      %s98 = sadd.s32 %s97, 1
      %s99 = scalar_select %p96, %s97, %s98
      %p102 = pneg %p96
      %p103 = scmp.eq.s32.totalorder %s17, 1
      %p104 = por %p102, %p103
      %p105 = scmp.ne.s32.totalorder %s97, %s100
      %p106 = scmp.eq.s32.totalorder %s17, 0
      %p107 = por %p105, %p106
      %p108 = scmp.ne.s32.totalorder %s97, %s100
      %p109 = scmp.eq.s32.totalorder %s22, 1
      %p110 = por %p108, %p109
      %p111 = scmp.ne.s32.totalorder %s100, %s101
      %p112 = scmp.eq.s32.totalorder %s22, 0
      %p113 = por %p111, %p112
      %p114 = scmp.ne.s32.totalorder %s100, %s101
      %p115 = scmp.eq.s32.totalorder %s23, 1
      %p116 = por %p114, %p115
      %p118 = scmp.ne.s32.totalorder %s101, %s117
      %p119 = scmp.eq.s32.totalorder %s23, 0
      %p120 = por %p118, %p119
      %p121 = scmp.le.s32.totalorder 1, %s17
      %p122 = scmp.lt.s32.totalorder %s17, 3
      %p123 = pnand %p121, %p122
      %p124 = pneg %p123
      // Predicated region
      $region9: #{tpu_custom_call.1} parent=5 // pred_check
        _
      $region10: #{tpu_custom_call.1} parent=5 // pred_check_branch
        %126 = sbr.rel (%p123) target = $region12
      $region11: #{tpu_custom_call.1} parent=5 // pred_region
        %s127 = ssub.s32 %s17, 1
      $region12: #{tpu_custom_call.1} parent=5 // pred_fallthru
        _
      %p128 = scmp.lt.s32.totalorder %s17, 2
      // Predicated region
      $region13: #{tpu_custom_call.1} parent=5 // pred_check
        %p129 = pneg %p128
      $region14: #{tpu_custom_call.1} parent=5 // pred_check_branch
        %131 = sbr.rel (%p129) target = $region16
      $region15: #{tpu_custom_call.1} parent=5 // pred_region
        // Predicated region
        $region17: #{tpu_custom_call.1} parent=15 // pred_check
          %p132 = pneg %p51
        $region18: #{tpu_custom_call.1} parent=15 // pred_check_branch
          %134 = sbr.rel (%p132) target = $region20
        $region19: #{tpu_custom_call.1} parent=15 // pred_region
          %s135 = sand.u32 %s41, 1
          %s136 = scalar_lea.sflag [#allocation3], %s135
          %s137 = sand.u32 %s41, 1
          %s138 = smul.addr %s137, 8
          %s139 = scalar_lea.vmem [#allocation2], %s138
          %s140 = smul.u32 2, %s25
          %s142 = ssub.s32 128, 128
          %143 = vsyncadd %s136, %s142
          %s144 = smul.addr %s24, 2
          %s145 = sadd.s32 %s140, %s144
          %s146 = smul.addr %s145, 64
          %s147 = scalar_lea.hbm %s0, %s146
          %s149 = sshll.u32 %s139, 4
          %s150 = int_to_ptr.vmem [resolvable:$true] %s149
          %152 = dma.hbm_to_vmem [thread:$0]  %s147, 128, %s150, %s136
        $region20: #{tpu_custom_call.1} parent=15 // pred_fallthru
          _
        // Predicated region
        $region21: #{tpu_custom_call.1} parent=15 // pred_check
          %p153 = pneg %p79
        $region22: #{tpu_custom_call.1} parent=15 // pred_check_branch
          %155 = sbr.rel (%p153) target = $region24
        $region23: #{tpu_custom_call.1} parent=15 // pred_region
          %s156 = sand.u32 %s69, 1
          %s157 = scalar_lea.sflag [#allocation6], %s156
          %s158 = sand.u32 %s69, 1
          %s159 = smul.addr %s158, 2
          %s160 = scalar_lea.vmem [#allocation5], %s159
          %s161 = smul.u32 2, %s25
          %s163 = ssub.s32 32, 32
          %164 = vsyncadd %s157, %s163
          %s165 = smul.addr %s24, 2
          %s166 = sadd.s32 %s161, %s165
          %s167 = smul.addr %s166, 16
          %s168 = scalar_lea.hbm %s1, %s167
          %s170 = sshll.u32 %s160, 4
          %s171 = int_to_ptr.vmem [resolvable:$true] %s170
          %173 = dma.hbm_to_vmem [thread:$0]  %s168, 32, %s171, %s157
        $region24: #{tpu_custom_call.1} parent=15 // pred_fallthru
          _
      $region16: #{tpu_custom_call.1} parent=5 // pred_fallthru
        _
      %p174 = scmp.le.s32.totalorder 1, %s17
      %p175 = scmp.lt.s32.totalorder %s17, 3
      %p176 = pnand %p174, %p175
      %p177 = pneg %p176
      // Predicated region
      $region25: #{tpu_custom_call.1} parent=5 // pred_check
        _
      $region26: #{tpu_custom_call.1} parent=5 // pred_check_branch
        %179 = sbr.rel (%p176) target = $region28
      $region27: #{tpu_custom_call.1} parent=5 // pred_region
        %s180 = ssub.s32 %s17, 1
        %s181 = sand.u32 %s44, 1
        %s182 = scalar_lea.sflag [#allocation3], %s181
        %s183 = sand.u32 %s44, 1
        %s184 = smul.addr %s183, 8
        %s185 = scalar_lea.vmem [#allocation2], %s184
        // Predicated region
        $region29: #{tpu_custom_call.1} parent=27 // pred_check
          %p186 = pneg %p57
        $region30: #{tpu_custom_call.1} parent=27 // pred_check_branch
          %188 = sbr.rel (%p186) target = $region32
        $region31: #{tpu_custom_call.1} parent=27 // pred_region
          %189 = dma.done %s182, 128
        $region32: #{tpu_custom_call.1} parent=27 // pred_fallthru
          _
        %s190 = sand.u32 %s72, 1
        %s191 = scalar_lea.sflag [#allocation6], %s190
        %s192 = sand.u32 %s72, 1
        %s193 = smul.addr %s192, 2
        %s194 = scalar_lea.vmem [#allocation5], %s193
        // Predicated region
        $region33: #{tpu_custom_call.1} parent=27 // pred_check
          %p195 = pneg %p85
        $region34: #{tpu_custom_call.1} parent=27 // pred_check_branch
          %197 = sbr.rel (%p195) target = $region36
        $region35: #{tpu_custom_call.1} parent=27 // pred_region
          %198 = dma.done %s191, 32
        $region36: #{tpu_custom_call.1} parent=27 // pred_fallthru
          _
        %s199 = sand.u32 %s44, 1
        %s200 = scalar_lea.sflag [#allocation3], %s199
        %s201 = sand.u32 %s44, 1
        %s202 = smul.addr %s201, 8
        %s203 = scalar_lea.vmem [#allocation2], %s202
        %p204 = pneg %p57
        %p205 = pneg %p54
        %s206 = sand.u32 %s72, 1
        %s207 = scalar_lea.sflag [#allocation6], %s206
        %s208 = sand.u32 %s72, 1
        %s209 = smul.addr %s208, 2
        %s210 = scalar_lea.vmem [#allocation5], %s209
        %p211 = pneg %p85
        %p212 = pneg %p82
        %p213 = pneg %p113
        %p214 = pneg %p110
        %s215 = sand.u32 %s100, 1
        %s216 = scalar_lea.sflag [#allocation4], %s215
        %s217 = sand.u32 %s100, 1
        %s218 = scalar_lea.vmem [#allocation7], %s217
        %s219 = smul.u32 2, %s27
        %s220 = smul.u32 2, %s27
        %v221 = vld [vmem:[%s185] sm:$0xff]
        %v222 = vld [vmem:[%s194] sm:$0x3]
        %v223 = vlaneseq
        %v224 = vand.u32 %v223, 127
        %v225 = vadd.s32 %v224, 128
        %s226 = smul.u32 %s27, 256
        %v227 = vstv %s226
        %v228 = vadd.s32 %v227, %v224
        %v229 = vadd.s32 %v227, %v225
        %vm230 = vcmp.lt.s32.totalorder %v228, 256
        %vm231 = vcmp.lt.s32.totalorder %v229, 256
        %v232 = vsel %vm230, 1, 0
        %v233 = vsel %vm231, 1, 0
        %v234 = vcvt.s32.f32 %v232
        %v235 = vcvt.s32.f32 %v233
        %vm236 = vcmp.eq.s32.totalorder %v232, 1
        %vm237 = vcmp.eq.s32.totalorder %v233, 1
        %v239 = vcombine.high %v221, %v221
        %v241 = vsel %vm236, %v221, 0.0
        %v242 = vsel %vm237, %v239, 0.0
        %vm243 = vcmask 1043456
        %v244 = vsel %vm243, %v241, -inf
        %v245 = vrot.slane %v244, 4
        %v246 = vmax.f32 %v244, %v245
        %v247 = vrot.slane %v246, 2
        %v248 = vmax.f32 %v246, %v247
        %v249 = vrot.slane %v248, 1
        %v250 = vmax.f32 %v248, %v249
        %v251 = vsel %vm243, %v242, -inf
        %v252 = vrot.slane %v251, 4
        %v253 = vmax.f32 %v251, %v252
        %v254 = vrot.slane %v253, 2
        %v255 = vmax.f32 %v253, %v254
        %v256 = vrot.slane %v255, 1
        %v257 = vmax.f32 %v255, %v256
        %v258 = vsub.f32 %v241, %v250
        %v259 = vsub.f32 %v242, %v257
        %v260 = vmul.f32 %v258, 1.442695
        %v261 = vpow.pop %v260
        %v262 = vmul.f32 %v259, 1.442695
        %v263 = vpow.pop %v262
        %v264 = vsel %vm243, %v261, 0.0
        %v265 = vrot.slane %v264, 4
        %v266 = vadd.f32 %v264, %v265
        %v267 = vrot.slane %v266, 2
        %v268 = vadd.f32 %v266, %v267
        %v269 = vrot.slane %v268, 1
        %v270 = vadd.f32 %v268, %v269
        %v271 = vsel %vm243, %v263, 0.0
        %v272 = vrot.slane %v271, 4
        %v273 = vadd.f32 %v271, %v272
        %v274 = vrot.slane %v273, 2
        %v275 = vadd.f32 %v273, %v274
        %v276 = vrot.slane %v275, 1
        %v277 = vadd.f32 %v275, %v276
        %v278 = vlog2.pop %v270
        %v279 = vmul.f32 %v278, 0.6931472
        %v280 = vlog2.pop %v277
        %v281 = vmul.f32 %v280, 0.6931472
        %v282 = vsub.f32 %v258, %v279
        %v283 = vsub.f32 %v259, %v281
        %v284 = vrcp.pop %v270
        %v285 = vrcp.pop %v277
        %v286 = vmul.f32 %v261, %v284
        %v287 = vmul.f32 %v263, %v285
        %v288 = vlaneseq
        %v289 = vshrl.u32 %v288, 7
        %v290 = vlaneseq
        %v291 = vshrl.u32 %v290, 7
        %v292 = vsub.s32 0, %v291
        %v293 = vrot.slane %v222, %v292
        %v294 = vlaneseq
        %v295 = vshrl.u32 %v294, 7
        %v296 = vsub.s32 1, %v295
        %v297 = vrot.slane %v222, %v296
        %vm298 = vcmp.eq.s32.totalorder %v289, %v293
        %vm299 = vcmp.eq.s32.totalorder %v289, %v297
        %v300 = vsel %vm298, 1, 0
        %v301 = vsel %vm299, 1, 0
        %v302 = vcvt.s32.f32 %v300
        %v303 = vcvt.s32.f32 %v301
        %v304 = vmul.f32 %v302, %v282
        %v305 = vmul.f32 %v303, %v283
        %v306 = vmul.f32 %v304, %v234
        %v307 = vmul.f32 %v305, %v235
        %v308 = vsel %vm243, %v306, 0.0
        %v309 = vsel %vm243, %v307, 0.0
        %v310 = vadd.f32 %v308, %v309
        %311 = vadd.xlane.f32.xlu0 %v310
        %v312 = vpop.xlane.xlu0 %311
        %v313 = vrot.slane %v312, 4
        %v314 = vadd.f32 %v312, %v313
        %v315 = vrot.slane %v314, 2
        %v316 = vadd.f32 %v314, %v315
        %v317 = vrot.slane %v316, 1
        %v318 = vadd.f32 %v316, %v317
        %s319 = vtos %v318
        %s320 = ssub.f32 0.0, %s319
        %v321 = vmax.f32 %v286, 1e-07
        %v322 = vmax.f32 %v287, 1e-07
        %v323 = vmin.f32 %v321, 0.9999999
        %v324 = vmin.f32 %v322, 0.9999999
        %v325 = vmax.f32 %v282, -16.118095
        %v326 = vmax.f32 %v283, -16.118095
        %v327 = vmin.f32 %v325, -1.0000001e-07
        %v328 = vmin.f32 %v326, -1.0000001e-07
        %v329 = vmul.f32 %v323, %v327
        %v330 = vmul.f32 %v324, %v328
        %v331 = vmul.f32 %v329, %v234
        %v332 = vmul.f32 %v330, %v235
        %v333 = vsel %vm243, %v331, 0.0
        %v334 = vsel %vm243, %v332, 0.0
        %v335 = vadd.f32 %v333, %v334
        %336 = vadd.xlane.f32.xlu0 %v335
        %v337 = vpop.xlane.xlu0 %336
        %v338 = vrot.slane %v337, 4
        %v339 = vadd.f32 %v337, %v338
        %v340 = vrot.slane %v339, 2
        %v341 = vadd.f32 %v339, %v340
        %v342 = vrot.slane %v341, 1
        %v343 = vadd.f32 %v341, %v342
        %s344 = vtos %v343
        %s345 = ssub.f32 0.0, %s344
        %vm346 = vcmp.eq.s32.totalorder %v224, 0
        %vm347 = vcmp.eq.s32.totalorder %v224, 1
        %v348 = vstv %s345
        %v349 = vsel %vm347, %v348, 0.0
        %v350 = vstv %s320
        %v351 = vsel %vm346, %v350, %v349
        %352 = vst [vmem:[%s218] sm:$0x1] %v351
        %s353 = sand.u32 %s100, 1
        %s354 = scalar_lea.sflag [#allocation4], %s353
        %s355 = sand.u32 %s100, 1
        %s356 = scalar_lea.vmem [#allocation7], %s355
        // Predicated region
        $region37: #{tpu_custom_call.1} parent=27 // pred_check
          %p357 = pneg %p110
        $region38: #{tpu_custom_call.1} parent=27 // pred_check_branch
          %359 = sbr.rel (%p357) target = $region40
        $region39: #{tpu_custom_call.1} parent=27 // pred_region
          %s361 = ssub.s32 16, 16
          %362 = vsyncadd %s354, %s361
          %s363 = sadd.s32 %s27, %s26
          %s364 = smul.addr %s363, 16
          %s365 = scalar_lea.hbm %s2, %s364
          %s367 = sshll.u32 %s356, 4
          %s368 = int_to_ptr.vmem [resolvable:$true] %s367
          %370 = dma.vmem_to_hbm [thread:$0]  %s368, 16, %s365, %s354
        $region40: #{tpu_custom_call.1} parent=27 // pred_fallthru
          _
      $region28: #{tpu_custom_call.1} parent=5 // pred_fallthru
        _
      %p371 = scmp.le.s32.totalorder 2, %s17
      // Predicated region
      $region41: #{tpu_custom_call.1} parent=5 // pred_check
        %p372 = pneg %p371
      $region42: #{tpu_custom_call.1} parent=5 // pred_check_branch
        %374 = sbr.rel (%p372) target = $region44
      $region43: #{tpu_custom_call.1} parent=5 // pred_region
        %s375 = ssub.s32 %s17, 2
        // Predicated region
        $region45: #{tpu_custom_call.1} parent=43 // pred_check
          %p376 = pneg %p116
        $region46: #{tpu_custom_call.1} parent=43 // pred_check_branch
          %378 = sbr.rel (%p376) target = $region48
        $region47: #{tpu_custom_call.1} parent=43 // pred_region
          %s379 = sand.u32 %s101, 1
          %s380 = scalar_lea.sflag [#allocation4], %s379
          %s381 = sand.u32 %s101, 1
          %s382 = scalar_lea.vmem [#allocation7], %s381
          %383 = dma.done %s380, 16
        $region48: #{tpu_custom_call.1} parent=43 // pred_fallthru
          _
      $region44: #{tpu_custom_call.1} parent=5 // pred_fallthru
        _
    $region6: #{tpu_custom_call.1} parent=1 // loop_footer
      %s21 = sadd.s32 1, %s17
    $region7: #{tpu_custom_call.1} parent=1 // loop_footer_branch
      %16 = sbr.rel target = $region3
    $region8: #{tpu_custom_call.1} parent=1 // loop_exit
      _
    %384 = vsyncpa [#allocation3], 1
    %s385 = scalar_lea.sflag [#allocation3], 1
    %386 = vsyncpa %s385, 1
    %387 = vsyncpa [#allocation6], 1
    %s388 = scalar_lea.sflag [#allocation6], 1
    %389 = vsyncpa %s388, 1
    %390 = vsyncpa [#allocation4], 1
    %s391 = scalar_lea.sflag [#allocation4], 1
    %392 = vsyncpa %s391, 1

</llo_original>
